<compile_context>
chip_gen: v7x
topology: tpu7x:2x2x1
jax: 0.10.0
libtpu: 0.0.40
codegen_flags: <defaults>
</compile_context>

<pallas_src>
import functools

import jax
import jax.numpy as jnp
from jax import lax
from jax.experimental import pallas as pl
from jax.experimental.pallas import tpu as pltpu

EPS = 1e-5                                    # nn.BatchNorm2d default eps
NEG_BIG = float(jnp.finfo(jnp.float32).min)   # "-inf" pad value for max-pool edges


def fused_conv_bn_relu_pool_kernel(p_ref, w_ref, o_ref, *, n, ho, wo, hp, wp, eps):
    # ---- Conv2d as a single MXU matmul on lane-dense zero-padded operands ----
    # p_ref: (M, Kp) im2col patches, w_ref: (Kp, Cp) weights; M = n*ho*wo.
    conv = jnp.dot(p_ref[...], w_ref[...], preferred_element_type=jnp.float32)  # (M, Cp)
    m = n * ho * wo
    cp = conv.shape[-1]

    # ---- BatchNorm2d batch statistics in ONE pass (training mode, biased var) ----
    s1 = jnp.sum(conv, axis=0)                 # (Cp,)
    s2 = jnp.sum(conv * conv, axis=0)          # (Cp,)
    mean = s1 * (1.0 / m)
    var = s2 * (1.0 / m) - mean * mean
    scale = lax.rsqrt(var + eps)               # > 0 (gamma initialised to 1)

    # ---- MaxPool2d(3, stride=2, padding=1) on the RAW conv output ----
    # BN scale is positive and ReLU is monotone, so pooling first is exact and
    # shrinks the normalise+ReLU work by 4x.
    y = conv.reshape(n, ho, wo, cp)            # free retiling (lane dim unchanged)

    def pad_lo_hi(a, axis, lo, hi):
        parts = []
        if lo:
            shp = list(a.shape); shp[axis] = lo
            parts.append(jnp.full(shp, NEG_BIG, jnp.float32))
        parts.append(a)
        if hi:
            shp = list(a.shape); shp[axis] = hi
            parts.append(jnp.full(shp, NEG_BIG, jnp.float32))
        return jnp.concatenate(parts, axis=axis) if len(parts) > 1 else a

    # Pool along H: pairwise max of adjacent (padded) rows, then fold row pairs.
    yh = pad_lo_hi(y, axis=1, lo=1, hi=max(0, 2 * hp - ho))            # (n, 2hp+1, wo, cp)
    ph = jnp.maximum(yh[:, 0:2 * hp, :, :], yh[:, 1:2 * hp + 1, :, :])  # (n, 2hp, wo, cp)
    yrow = jnp.max(ph.reshape(n, hp, 2, wo, cp), axis=2)                # (n, hp, wo, cp)

    # Pool along W: same pairwise-max trick on the second-minor axis.
    yw = pad_lo_hi(yrow, axis=2, lo=1, hi=max(0, 2 * wp - wo))          # (n, hp, 2wp+1, cp)
    pw = jnp.maximum(yw[:, :, 0:2 * wp, :], yw[:, :, 1:2 * wp + 1, :])  # (n, hp, 2wp, cp)
    pooled = jnp.max(pw.reshape(n, hp, wp, 2, cp), axis=3)              # (n, hp, wp, cp)

    # ---- BN (gamma=1, beta=0) + ReLU on the pooled tensor; one full-block store ----
    o_ref[...] = jnp.maximum((pooled - mean) * scale, 0.0)


@jax.jit
def module1_forward(x_nchw, w_hwio):
    """Conv2d(1,64,k=7,s=2,p=3,bias=False) -> BatchNorm2d -> ReLU -> MaxPool(3,2,1)."""
    N, Cin, H, W = x_nchw.shape
    KH, KW, _, Cout = w_hwio.shape
    stride, pad = 2, 3
    Ho = (H + 2 * pad - KH) // stride + 1
    Wo = (W + 2 * pad - KW) // stride + 1
    Hp = (Ho + 2 * 1 - 3) // 2 + 1
    Wp = (Wo + 2 * 1 - 3) // 2 + 1

    M = N * Ho * Wo
    K = KH * KW * Cin
    Kp = ((K + 127) // 128) * 128        # lane-pad contraction dim
    Cp = ((Cout + 127) // 128) * 128     # lane-pad channels -> unmasked full-width stores

    # ---- glue: lane-friendly im2col (Cin == 1) ----
    # Stack the KH*KW taps on a NEW LEADING axis and transpose/reshape once,
    # instead of concatenating 49 slabs whose minor dim is 1.
    x = x_nchw.reshape(N, H, W).astype(jnp.float32)          # Cin == 1
    xp = jnp.pad(x, ((0, 0), (pad, pad), (pad, pad)))
    taps = [xp[:, kh:kh + stride * Ho:stride, kw:kw + stride * Wo:stride]
            for kh in range(KH) for kw in range(KW)]          # each (N, Ho, Wo)
    patches = jnp.stack(taps, axis=0)                         # (K, N, Ho, Wo)
    patches = jnp.transpose(patches, (1, 2, 3, 0)).reshape(M, K)
    patches = jnp.pad(patches, ((0, 0), (0, Kp - K)))         # (M, Kp)

    w2 = w_hwio.reshape(K, Cout).astype(jnp.float32)          # row order = (kh, kw, cin)
    w2 = jnp.pad(w2, ((0, Kp - K), (0, Cp - Cout)))           # (Kp, Cp)

    # ---- single fused Pallas kernel (conv + BN stats + pool + BN/ReLU) ----
    # TODO(synk): at realistic stem sizes (e.g. 224x224, larger batch) tile the matmul
    # over M with a real grid (dimension_semantics=("parallel", ...)) and accumulate
    # BN sum/sumsq in VMEM scratch; the whole-array block here is fine at toy size.
    out = pl.pallas_call(
        functools.partial(fused_conv_bn_relu_pool_kernel,
                          n=N, ho=Ho, wo=Wo, hp=Hp, wp=Wp, eps=EPS),
        out_shape=jax.ShapeDtypeStruct((N, Hp, Wp, Cp), jnp.float32),
        grid=(1,),
        in_specs=[pl.BlockSpec((M, Kp), lambda i: (0, 0)),
                  pl.BlockSpec((Kp, Cp), lambda i: (0, 0))],
        out_specs=pl.BlockSpec((N, Hp, Wp, Cp), lambda i: (0, 0, 0, 0)),
        compiler_params=pltpu.CompilerParams(dimension_semantics=("arbitrary",)),
    )(patches, w2)

    return jnp.transpose(out[..., :Cout], (0, 3, 1, 2))       # NHWC(+pad) -> NCHW


@jax.jit
def reference_forward(x_nchw, w_hwio):
    """Pure-JAX reference for correctness checking."""
    x = jnp.transpose(x_nchw, (0, 2, 3, 1)).astype(jnp.float32)
    y = lax.conv_general_dilated(
        x, w_hwio.astype(jnp.float32), window_strides=(2, 2),
        padding=((3, 3), (3, 3)), dimension_numbers=("NHWC", "HWIO", "NHWC"))
    mean = jnp.mean(y, axis=(0, 1, 2), keepdims=True)
    var = jnp.mean((y - mean) ** 2, axis=(0, 1, 2), keepdims=True)
    y = jnp.maximum((y - mean) * lax.rsqrt(var + EPS), 0.0)
    y = lax.reduce_window(y, -jnp.inf, lax.max, (1, 3, 3, 1), (1, 2, 2, 1),
                          ((0, 0), (1, 1), (1, 1), (0, 0)))
    return jnp.transpose(y, (0, 3, 1, 2))


if __name__ == "__main__":
    key = jax.random.PRNGKey(0)
    kx, kw = jax.random.split(key)

    # Input consistent with Conv2d(in_channels=1): (N=2, C=1, H=16, W=16)
    x = jax.random.normal(kx, (2, 1, 16, 16), dtype=jnp.float32)

    # Deterministic kaiming_normal_(mode='fan_out'): std = sqrt(2 / (Cout*KH*KW))
    Cout, Cin, KH, KW = 64, 1, 7, 7
    std = (2.0 / (Cout * KH * KW)) ** 0.5
    w_hwio = std * jax.random.normal(kw, (KH, KW, Cin, Cout), dtype=jnp.float32)

    out = jax.block_until_ready(module1_forward(x, w_hwio))
    ref = jax.block_until_ready(reference_forward(x, w_hwio))
    assert out.shape == (2, 64, 4, 4), out.shape
    assert jnp.allclose(out, ref, atol=1e-4, rtol=1e-4), float(jnp.max(jnp.abs(out - ref)))
    print("KERNEL_OK")
</pallas_src>

<mosaic_0001>
module attributes {stable_mosaic.version = 11 : i64} {
  func.func @fused_conv_bn_relu_pool_kernel(%arg0: i32, %arg1: memref<128x128xf32, #tpu.memory_space<vmem>>, %arg2: memref<128x128xf32, #tpu.memory_space<vmem>>, %arg3: memref<2x4x4x128xf32, #tpu.memory_space<vmem>>) attributes {dimension_semantics = [#tpu.dimension_semantics<arbitrary>], iteration_bounds = array<i64: 1>, scalar_prefetch = 0 : i64, scratch_operands = 0 : i64, tpu.core_type = #tpu.core_type<tc>, window_params = [{pipeline_mode = #tpu.pipeline_mode<synchronous>, transform_indices = @transform_0, window_bounds = array<i64: 128, 128>}, {pipeline_mode = #tpu.pipeline_mode<synchronous>, transform_indices = @transform_1, window_bounds = array<i64: 128, 128>}, {pipeline_mode = #tpu.pipeline_mode<synchronous>, transform_indices = @transform_2, window_bounds = array<i64: 2, 4, 4, 128>}]} {
    %c0 = arith.constant 0 : index
    %c0_0 = arith.constant 0 : index
    %0 = vector.load %arg1[%c0, %c0_0] : memref<128x128xf32, #tpu.memory_space<vmem>>, vector<128x128xf32>
    %c0_1 = arith.constant 0 : index
    %c0_2 = arith.constant 0 : index
    %1 = vector.load %arg2[%c0_1, %c0_2] : memref<128x128xf32, #tpu.memory_space<vmem>>, vector<128x128xf32>
    %cst = arith.constant dense<0.000000e+00> : vector<128x128xf32>
    %2 = tpu.matmul %0, %1, %cst {dimension_numbers = #tpu.dot_dimension_numbers<[1], [0], [0], [1], [0, 0, 1, 1], [], []>} : vector<128x128xf32>, vector<128x128xf32>, vector<128x128xf32> -> vector<128x128xf32>
    %cst_3 = arith.constant dense<0.000000e+00> : vector<128xf32>
    %3 = vector.multi_reduction <add>, %2, %cst_3 [0] : vector<128x128xf32> to vector<128xf32>
    %4 = arith.mulf %2, %2 : vector<128x128xf32>
    %cst_4 = arith.constant dense<0.000000e+00> : vector<128xf32>
    %5 = vector.multi_reduction <add>, %4, %cst_4 [0] : vector<128x128xf32> to vector<128xf32>
    %cst_5 = arith.constant 7.812500e-03 : f32
    %6 = vector.broadcast %cst_5 : f32 to vector<128xf32>
    %7 = arith.mulf %3, %6 : vector<128xf32>
    %cst_6 = arith.constant 7.812500e-03 : f32
    %8 = vector.broadcast %cst_6 : f32 to vector<128xf32>
    %9 = arith.mulf %5, %8 : vector<128xf32>
    %10 = arith.mulf %7, %7 : vector<128xf32>
    %11 = arith.subf %9, %10 : vector<128xf32>
    %cst_7 = arith.constant 9.99999974E-6 : f32
    %12 = vector.broadcast %cst_7 : f32 to vector<128xf32>
    %13 = arith.addf %11, %12 : vector<128xf32>
    %14 = math.rsqrt %13 : vector<128xf32>
    %15 = vector.shape_cast %2 : vector<128x128xf32> to vector<2x8x8x128xf32>
    %cst_8 = arith.constant -3.40282347E+38 : f32
    %16 = vector.broadcast %cst_8 : f32 to vector<2x1x8x128xf32>
    %17 = tpu.concatenate %16, %15 in 1 : vector<2x1x8x128xf32>, vector<2x8x8x128xf32> -> vector<2x9x8x128xf32>
    %18 = vector.extract_strided_slice %17 {offsets = [0, 0, 0, 0], sizes = [2, 8, 8, 128], strides = [1, 1, 1, 1]} : vector<2x9x8x128xf32> to vector<2x8x8x128xf32>
    %19 = vector.extract_strided_slice %17 {offsets = [0, 1, 0, 0], sizes = [2, 8, 8, 128], strides = [1, 1, 1, 1]} : vector<2x9x8x128xf32> to vector<2x8x8x128xf32>
    %20 = arith.maximumf %18, %19 : vector<2x8x8x128xf32>
    %21 = vector.shape_cast %20 : vector<2x8x8x128xf32> to vector<2x4x2x8x128xf32>
    %cst_9 = arith.constant dense<0xFF800000> : vector<2x4x8x128xf32>
    %22 = vector.multi_reduction <maximumf>, %21, %cst_9 [2] : vector<2x4x2x8x128xf32> to vector<2x4x8x128xf32>
    %cst_10 = arith.constant -3.40282347E+38 : f32
    %23 = vector.broadcast %cst_10 : f32 to vector<2x4x1x128xf32>
    %24 = tpu.concatenate %23, %22 in 2 : vector<2x4x1x128xf32>, vector<2x4x8x128xf32> -> vector<2x4x9x128xf32>
    %25 = vector.extract_strided_slice %24 {offsets = [0, 0, 0, 0], sizes = [2, 4, 8, 128], strides = [1, 1, 1, 1]} : vector<2x4x9x128xf32> to vector<2x4x8x128xf32>
    %26 = vector.extract_strided_slice %24 {offsets = [0, 0, 1, 0], sizes = [2, 4, 8, 128], strides = [1, 1, 1, 1]} : vector<2x4x9x128xf32> to vector<2x4x8x128xf32>
    %27 = arith.maximumf %25, %26 : vector<2x4x8x128xf32>
    %28 = vector.shape_cast %27 : vector<2x4x8x128xf32> to vector<2x4x4x2x128xf32>
    %cst_11 = arith.constant dense<0xFF800000> : vector<2x4x4x128xf32>
    %29 = vector.multi_reduction <maximumf>, %28, %cst_11 [3] : vector<2x4x4x2x128xf32> to vector<2x4x4x128xf32>
    %30 = vector.shape_cast %7 : vector<128xf32> to vector<1x1x1x128xf32>
    %31 = vector.broadcast %30 : vector<1x1x1x128xf32> to vector<2x4x4x128xf32>
    %32 = arith.subf %29, %31 : vector<2x4x4x128xf32>
    %33 = vector.shape_cast %14 : vector<128xf32> to vector<1x1x1x128xf32>
    %34 = vector.broadcast %33 : vector<1x1x1x128xf32> to vector<2x4x4x128xf32>
    %35 = arith.mulf %32, %34 : vector<2x4x4x128xf32>
    %cst_12 = arith.constant 0.000000e+00 : f32
    %36 = vector.broadcast %cst_12 : f32 to vector<2x4x4x128xf32>
    %37 = arith.maximumf %35, %36 : vector<2x4x4x128xf32>
    %c0_13 = arith.constant 0 : index
    %c0_14 = arith.constant 0 : index
    %c0_15 = arith.constant 0 : index
    %c0_16 = arith.constant 0 : index
    %38 = vector.load %arg3[%c0_13, %c0_14, %c0_15, %c0_16] : memref<2x4x4x128xf32, #tpu.memory_space<vmem>>, vector<2x4x4x128xf32>
    tpu.vector_store %arg3[%c0_13, %c0_14, %c0_15, %c0_16], %37 {strides = array<i32>} : memref<2x4x4x128xf32, #tpu.memory_space<vmem>>, vector<2x4x4x128xf32>,
    return
  }
  func.func @transform_0(%arg0: i32) -> (i32, i32) {
    %c0_i32 = arith.constant 0 : i32
    %c0_i32_0 = arith.constant 0 : i32
    %c0_i32_1 = arith.constant 0 : i32
    return %c0_i32, %c0_i32_0 : i32, i32
  }
  func.func @transform_1(%arg0: i32) -> (i32, i32) {
    %c0_i32 = arith.constant 0 : i32
    %c0_i32_0 = arith.constant 0 : i32
    %c0_i32_1 = arith.constant 0 : i32
    return %c0_i32, %c0_i32_0 : i32, i32
  }
  func.func @transform_2(%arg0: i32) -> (i32, i32, i32, i32) {
    %c0_i32 = arith.constant 0 : i32
    %c0_i32_0 = arith.constant 0 : i32
    %c0_i32_1 = arith.constant 0 : i32
    %c0_i32_2 = arith.constant 0 : i32
    %c0_i32_3 = arith.constant 0 : i32
    return %c0_i32, %c0_i32_0, %c0_i32_1, %c0_i32_2 : i32, i32, i32, i32
  }
}

</mosaic_0001>

<llo_original>
// kernel: module1_forward.1
$region0: #{module1_forward.1}
  #allocation0 [shape = 'u32[]', space=smem, size = 0x4, offset = 0x4, fixed_abs, tag = 'smem constant byte address 0x4 - core index']
  #allocation1 [shape = 'u32[144,128]{1,0:T(1,128)}', space=vmem, size = 0x12000, scoped, tag = 'internal scratch']
  %s0 = inlined_call_operand.vmem [shape: f32[128,128], index: 0, kind: input, shape index: {}]
  %s1 = inlined_call_operand.vmem [shape: f32[128,128], index: 1, kind: input, shape index: {}]
  %s2 = inlined_call_operand.vmem [shape: f32[2,4,4,128], index: 2, kind: output, shape index: {}]
  %s3 = sld [smem:[#allocation0]]
  $region18: #{module1_forward.1} parent=0
    _
  %s5 = ssub.s32 1, %s3
  %s6 = scalar_select 0, %s5, %s3
  // Predicated region
  $region2: #{module1_forward.1} parent=0 // pred_check
    _
  $region3: #{module1_forward.1} parent=0 // pred_check_branch
    %8 = sbr.rel (0) target = $region5
  $region4: #{module1_forward.1} parent=0 // pred_region
    _
  $region5: #{module1_forward.1} parent=0 // pred_fallthru
    _
  // Predicated region
  $region6: #{module1_forward.1} parent=0 // pred_check
    _
  $region7: #{module1_forward.1} parent=0 // pred_check_branch
    %10 = sbr.rel (0) target = $region9
  $region8: #{module1_forward.1} parent=0 // pred_region
    _
  $region9: #{module1_forward.1} parent=0 // pred_fallthru
    _
  %v11 = vld [vmem:[%s0] sm:$0xff]
  %v12 = vld [vmem:[%s0 + $0x8] sm:$0xff]
  %v13 = vld [vmem:[%s0 + $0x10] sm:$0xff]
  %v14 = vld [vmem:[%s0 + $0x18] sm:$0xff]
  %v15 = vld [vmem:[%s0 + $0x20] sm:$0xff]
  %v16 = vld [vmem:[%s0 + $0x28] sm:$0xff]
  %v17 = vld [vmem:[%s0 + $0x30] sm:$0xff]
  %v18 = vld [vmem:[%s0 + $0x38] sm:$0xff]
  %v19 = vld [vmem:[%s0 + $0x40] sm:$0xff]
  %v20 = vld [vmem:[%s0 + $0x48] sm:$0xff]
  %v21 = vld [vmem:[%s0 + $0x50] sm:$0xff]
  %v22 = vld [vmem:[%s0 + $0x58] sm:$0xff]
  %v23 = vld [vmem:[%s0 + $0x60] sm:$0xff]
  %v24 = vld [vmem:[%s0 + $0x68] sm:$0xff]
  %v25 = vld [vmem:[%s0 + $0x70] sm:$0xff]
  %v26 = vld [vmem:[%s0 + $0x78] sm:$0xff]
  %v27 = vld [vmem:[%s1] sm:$0xff]
  %v28 = vld [vmem:[%s1 + $0x8] sm:$0xff]
  %v29 = vld [vmem:[%s1 + $0x10] sm:$0xff]
  %v30 = vld [vmem:[%s1 + $0x18] sm:$0xff]
  %v31 = vld [vmem:[%s1 + $0x20] sm:$0xff]
  %v32 = vld [vmem:[%s1 + $0x28] sm:$0xff]
  %v33 = vld [vmem:[%s1 + $0x30] sm:$0xff]
  %v34 = vld [vmem:[%s1 + $0x38] sm:$0xff]
  %v35 = vld [vmem:[%s1 + $0x40] sm:$0xff]
  %v36 = vld [vmem:[%s1 + $0x48] sm:$0xff]
  %v37 = vld [vmem:[%s1 + $0x50] sm:$0xff]
  %v38 = vld [vmem:[%s1 + $0x58] sm:$0xff]
  %v39 = vld [vmem:[%s1 + $0x60] sm:$0xff]
  %v40 = vld [vmem:[%s1 + $0x68] sm:$0xff]
  %v41 = vld [vmem:[%s1 + $0x70] sm:$0xff]
  %v42 = vld [vmem:[%s1 + $0x78] sm:$0xff]
  %43 = vmatprep.subr.mxu0 0.0
  %44 = vmatpush1.msra.mxu0 %v27
  %45 = vmatprep.subr.mxu0 0.0
  %46 = vmatpush1.msra.mxu0 %v28
  %47 = vmatprep.subr.mxu0 0.0
  %48 = vmatpush1.msra.mxu0 %v29
  %49 = vmatprep.subr.mxu0 0.0
  %50 = vmatpush1.msra.mxu0 %v30
  %51 = vmatprep.subr.mxu0 0.0
  %52 = vmatpush1.msra.mxu0 %v31
  %53 = vmatprep.subr.mxu0 0.0
  %54 = vmatpush1.msra.mxu0 %v32
  %55 = vmatprep.subr.mxu0 0.0
  %56 = vmatpush1.msra.mxu0 %v33
  %57 = vmatprep.subr.mxu0 0.0
  %58 = vmatpush1.msra.mxu0 %v34
  %59 = vmatprep.subr.mxu0 0.0
  %60 = vmatpush1.msra.mxu0 %v35
  %61 = vmatprep.subr.mxu0 0.0
  %62 = vmatpush1.msra.mxu0 %v36
  %63 = vmatprep.subr.mxu0 0.0
  %64 = vmatpush1.msra.mxu0 %v37
  %65 = vmatprep.subr.mxu0 0.0
  %66 = vmatpush1.msra.mxu0 %v38
  %67 = vmatprep.subr.mxu0 0.0
  %68 = vmatpush1.msra.mxu0 %v39
  %69 = vmatprep.subr.mxu0 0.0
  %70 = vmatpush1.msra.mxu0 %v40
  %71 = vmatprep.subr.mxu0 0.0
  %72 = vmatpush1.msra.mxu0 %v41
  %73 = vmatprep.subr.mxu0 0.0
  %74 = vmatpush1.msra.mxu0 %v42
  %75 = vmatprep.subr.mxu0 0.0
  %76 = vmatpush1.msra.mxu0 0.0
  %77 = vmatprep.subr.mxu0 0.0
  %78 = vmatpush1.msra.mxu0 0.0
  %79 = vmatprep.subr.mxu0 0.0
  %80 = vmatpush1.msra.mxu0 0.0
  %81 = vmatprep.subr.mxu0 0.0
  %82 = vmatpush1.msra.mxu0 0.0
  %83 = vmatprep.subr.mxu0 0.0
  %84 = vmatpush1.msra.mxu0 0.0
  %85 = vmatprep.subr.mxu0 0.0
  %86 = vmatpush1.msra.mxu0 0.0
  %87 = vmatprep.subr.mxu0 0.0
  %88 = vmatpush1.msra.mxu0 0.0
  %89 = vmatprep.subr.mxu0 0.0
  %90 = vmatpush1.msra.mxu0 0.0
  %91 = vmatprep.subr.mxu0 0.0
  %92 = vmatpush1.msra.mxu0 0.0
  %93 = vmatprep.subr.mxu0 0.0
  %94 = vmatpush1.msra.mxu0 0.0
  %95 = vmatprep.subr.mxu0 0.0
  %96 = vmatpush1.msra.mxu0 0.0
  %97 = vmatprep.subr.mxu0 0.0
  %98 = vmatpush1.msra.mxu0 0.0
  %99 = vmatprep.subr.mxu0 0.0
  %100 = vmatpush1.msra.mxu0 0.0
  %101 = vmatprep.subr.mxu0 0.0
  %102 = vmatpush1.msra.mxu0 0.0
  %103 = vmatprep.subr.mxu0 0.0
  %104 = vmatpush1.msra.mxu0 0.0
  %105 = vmatprep.subr.mxu0 0.0
  %106 = vmatpush1.msra.mxu0 0.0
  %107 = vmatprep.mubr.f32.mxu0 0.0
  %108 = vmatmul.mubr.f32.gmra.mrb[0].mxu0 %v11
  %v109 = vpop.f32.mrb[0].mxu0
  %v110 = vadd.f32 0.0, %v109
  %v111 = vpop.f32.mrb[0].mxu0
  %112 = vmatprep.mubr.f32.mxu0 0.0
  %113 = vmatmul.mubr.f32.gmra.mrb[0].mxu0 %v12
  %v114 = vpop.f32.mrb[0].mxu0
  %v115 = vadd.f32 0.0, %v114
  %v116 = vpop.f32.mrb[0].mxu0
  %117 = vmatprep.mubr.f32.mxu0 0.0
  %118 = vmatmul.mubr.f32.gmra.mrb[0].mxu0 %v13
  %v119 = vpop.f32.mrb[0].mxu0
  %v120 = vadd.f32 0.0, %v119
  %v121 = vpop.f32.mrb[0].mxu0
  %122 = vmatprep.mubr.f32.mxu0 0.0
  %123 = vmatmul.mubr.f32.gmra.mrb[0].mxu0 %v14
  %v124 = vpop.f32.mrb[0].mxu0
  %v125 = vadd.f32 0.0, %v124
  %v126 = vpop.f32.mrb[0].mxu0
  %127 = vmatprep.mubr.f32.mxu0 0.0
  %128 = vmatmul.mubr.f32.gmra.mrb[0].mxu0 %v15
  %v129 = vpop.f32.mrb[0].mxu0
  %v130 = vadd.f32 0.0, %v129
  %v131 = vpop.f32.mrb[0].mxu0
  %132 = vmatprep.mubr.f32.mxu0 0.0
  %133 = vmatmul.mubr.f32.gmra.mrb[0].mxu0 %v16
  %v134 = vpop.f32.mrb[0].mxu0
  %v135 = vadd.f32 0.0, %v134
  %v136 = vpop.f32.mrb[0].mxu0
  %137 = vmatprep.mubr.f32.mxu0 0.0
  %138 = vmatmul.mubr.f32.gmra.mrb[0].mxu0 %v17
  %v139 = vpop.f32.mrb[0].mxu0
  %v140 = vadd.f32 0.0, %v139
  %v141 = vpop.f32.mrb[0].mxu0
  %142 = vmatprep.mubr.f32.mxu0 0.0
  %143 = vmatmul.mubr.f32.gmra.mrb[0].mxu0 %v18
  %v144 = vpop.f32.mrb[0].mxu0
  %v145 = vadd.f32 0.0, %v144
  %v146 = vpop.f32.mrb[0].mxu0
  %147 = vmatprep.mubr.f32.mxu0 0.0
  %148 = vmatmul.mubr.f32.gmra.mrb[0].mxu0 %v19
  %v149 = vpop.f32.mrb[0].mxu0
  %v150 = vadd.f32 0.0, %v149
  %v151 = vpop.f32.mrb[0].mxu0
  %152 = vmatprep.mubr.f32.mxu0 0.0
  %153 = vmatmul.mubr.f32.gmra.mrb[0].mxu0 %v20
  %v154 = vpop.f32.mrb[0].mxu0
  %v155 = vadd.f32 0.0, %v154
  %v156 = vpop.f32.mrb[0].mxu0
  %157 = vmatprep.mubr.f32.mxu0 0.0
  %158 = vmatmul.mubr.f32.gmra.mrb[0].mxu0 %v21
  %v159 = vpop.f32.mrb[0].mxu0
  %v160 = vadd.f32 0.0, %v159
  %v161 = vpop.f32.mrb[0].mxu0
  %162 = vmatprep.mubr.f32.mxu0 0.0
  %163 = vmatmul.mubr.f32.gmra.mrb[0].mxu0 %v22
  %v164 = vpop.f32.mrb[0].mxu0
  %v165 = vadd.f32 0.0, %v164
  %v166 = vpop.f32.mrb[0].mxu0
  %167 = vmatprep.mubr.f32.mxu0 0.0
  %168 = vmatmul.mubr.f32.gmra.mrb[0].mxu0 %v23
  %v169 = vpop.f32.mrb[0].mxu0
  %v170 = vadd.f32 0.0, %v169
  %v171 = vpop.f32.mrb[0].mxu0
  %172 = vmatprep.mubr.f32.mxu0 0.0
  %173 = vmatmul.mubr.f32.gmra.mrb[0].mxu0 %v24
  %v174 = vpop.f32.mrb[0].mxu0
  %v175 = vadd.f32 0.0, %v174
  %v176 = vpop.f32.mrb[0].mxu0
  %177 = vmatprep.mubr.f32.mxu0 0.0
  %178 = vmatmul.mubr.f32.gmra.mrb[0].mxu0 %v25
  %v179 = vpop.f32.mrb[0].mxu0
  %v180 = vadd.f32 0.0, %v179
  %v181 = vpop.f32.mrb[0].mxu0
  %182 = vmatprep.mubr.f32.mxu0 0.0
  %183 = vmatmul.mubr.f32.gmra.mrb[0].mxu0 %v26
  %v184 = vpop.f32.mrb[0].mxu0
  %v185 = vadd.f32 0.0, %v184
  %v186 = vpop.f32.mrb[0].mxu0
  %187 = vdwg.mxu0
  %v188 = vadd.f32 %v110, %v115
  %v189 = vadd.f32 %v188, %v120
  %v190 = vadd.f32 %v189, %v125
  %v191 = vadd.f32 %v190, %v130
  %v192 = vadd.f32 %v191, %v135
  %v193 = vadd.f32 %v192, %v140
  %v194 = vadd.f32 %v193, %v145
  %v195 = vadd.f32 %v194, %v150
  %v196 = vadd.f32 %v195, %v155
  %v197 = vadd.f32 %v196, %v160
  %v198 = vadd.f32 %v197, %v165
  %v199 = vadd.f32 %v198, %v170
  %v200 = vadd.f32 %v199, %v175
  %v201 = vadd.f32 %v200, %v180
  %v202 = vadd.f32 %v201, %v185
  %v203 = vrot.slane %v202, 4
  %v204 = vadd.f32 %v202, %v203
  %v205 = vrot.slane %v204, 2
  %v206 = vadd.f32 %v204, %v205
  %v207 = vrot.slane %v206, 1
  %v208 = vadd.f32 %v206, %v207
  %v209 = vmul.f32 %v110, %v110
  %v210 = vmul.f32 %v115, %v115
  %v211 = vmul.f32 %v120, %v120
  %v212 = vmul.f32 %v125, %v125
  %v213 = vmul.f32 %v130, %v130
  %v214 = vmul.f32 %v135, %v135
  %v215 = vmul.f32 %v140, %v140
  %v216 = vmul.f32 %v145, %v145
  %v217 = vmul.f32 %v150, %v150
  %v218 = vmul.f32 %v155, %v155
  %v219 = vmul.f32 %v160, %v160
  %v220 = vmul.f32 %v165, %v165
  %v221 = vmul.f32 %v170, %v170
  %v222 = vmul.f32 %v175, %v175
  %v223 = vmul.f32 %v180, %v180
  %v224 = vmul.f32 %v185, %v185
  %v225 = vadd.f32 %v209, %v210
  %v226 = vadd.f32 %v225, %v211
  %v227 = vadd.f32 %v226, %v212
  %v228 = vadd.f32 %v227, %v213
  %v229 = vadd.f32 %v228, %v214
  %v230 = vadd.f32 %v229, %v215
  %v231 = vadd.f32 %v230, %v216
  %v232 = vadd.f32 %v231, %v217
  %v233 = vadd.f32 %v232, %v218
  %v234 = vadd.f32 %v233, %v219
  %v235 = vadd.f32 %v234, %v220
  %v236 = vadd.f32 %v235, %v221
  %v237 = vadd.f32 %v236, %v222
  %v238 = vadd.f32 %v237, %v223
  %v239 = vadd.f32 %v238, %v224
  %v240 = vrot.slane %v239, 4
  %v241 = vadd.f32 %v239, %v240
  %v242 = vrot.slane %v241, 2
  %v243 = vadd.f32 %v241, %v242
  %v244 = vrot.slane %v243, 1
  %v245 = vadd.f32 %v243, %v244
  %v246 = vmul.f32 %v208, 0.0078125
  %v247 = vmul.f32 %v245, 0.0078125
  %v248 = vmul.f32 %v246, %v246
  %v249 = vsub.f32 %v247, %v248
  %v250 = vadd.f32 %v249, 1e-05
  %v251 = vrsqrt.pop %v250
  %v252 = vmax.f32 %v110, -3.4028235e+38
  %v253 = vmax.f32 %v110, %v115
  %v254 = vmax.f32 %v115, %v120
  %v255 = vmax.f32 %v120, %v125
  %v256 = vmax.f32 %v125, %v130
  %v257 = vmax.f32 %v130, %v135
  %v258 = vmax.f32 %v135, %v140
  %v259 = vmax.f32 %v140, %v145
  %v260 = vmax.f32 %v150, -3.4028235e+38
  %v261 = vmax.f32 %v150, %v155
  %v262 = vmax.f32 %v155, %v160
  %v263 = vmax.f32 %v160, %v165
  %v264 = vmax.f32 %v165, %v170
  %v265 = vmax.f32 %v170, %v175
  %v266 = vmax.f32 %v175, %v180
  %v267 = vmax.f32 %v180, %v185
  %v268 = vmax.f32 %v252, %v253
  %v269 = vmax.f32 %v254, %v255
  %v270 = vmax.f32 %v256, %v257
  %v271 = vmax.f32 %v258, %v259
  %v272 = vmax.f32 %v260, %v261
  %v273 = vmax.f32 %v262, %v263
  %v274 = vmax.f32 %v264, %v265
  %v275 = vmax.f32 %v266, %v267
  %v284 = vrot.slane %v268, 7
  %v285 = vrot.slane %v269, 7
  %v286 = vrot.slane %v270, 7
  %v287 = vrot.slane %v271, 7
  %v288 = vrot.slane %v272, 7
  %v289 = vrot.slane %v273, 7
  %v290 = vrot.slane %v274, 7
  %v291 = vrot.slane %v275, 7
  %vm300 = vcmask 1040384
  %v301 = vsel %vm300, -3.4028235e+38, %v284
  %v302 = vsel %vm300, -3.4028235e+38, %v285
  %v303 = vsel %vm300, -3.4028235e+38, %v286
  %v304 = vsel %vm300, -3.4028235e+38, %v287
  %v305 = vsel %vm300, -3.4028235e+38, %v288
  %v306 = vsel %vm300, -3.4028235e+38, %v289
  %v307 = vsel %vm300, -3.4028235e+38, %v290
  %v308 = vsel %vm300, -3.4028235e+38, %v291
  %vm317 = vcmask 1046528
  %v318 = vrot.slane %v301, 1
  %v319 = vrot.slane %v284, 1
  %v320 = vsel %vm317, %v318, %v319
  %v321 = vrot.slane %v302, 1
  %v322 = vrot.slane %v285, 1
  %v323 = vsel %vm317, %v321, %v322
  %v324 = vrot.slane %v303, 1
  %v325 = vrot.slane %v286, 1
  %v326 = vsel %vm317, %v324, %v325
  %v327 = vrot.slane %v304, 1
  %v328 = vrot.slane %v287, 1
  %v329 = vsel %vm317, %v327, %v328
  %v330 = vrot.slane %v305, 1
  %v331 = vrot.slane %v288, 1
  %v332 = vsel %vm317, %v330, %v331
  %v333 = vrot.slane %v306, 1
  %v334 = vrot.slane %v289, 1
  %v335 = vsel %vm317, %v333, %v334
  %v336 = vrot.slane %v307, 1
  %v337 = vrot.slane %v290, 1
  %v338 = vsel %vm317, %v336, %v337
  %v339 = vrot.slane %v308, 1
  %v340 = vrot.slane %v291, 1
  %v341 = vsel %vm317, %v339, %v340
  %v350 = vmax.f32 %v301, %v320
  %v351 = vmax.f32 %v302, %v323
  %v352 = vmax.f32 %v303, %v326
  %v353 = vmax.f32 %v304, %v329
  %v354 = vmax.f32 %v305, %v332
  %v355 = vmax.f32 %v306, %v335
  %v356 = vmax.f32 %v307, %v338
  %v357 = vmax.f32 %v308, %v341
  %v366 = vcombine.high %v350, %v350
  %v368 = vunpack.c.l.s4 1983009808
  %v369 = vunpack.c.0.s8 %v368
  %v370 = vlaneseq
  %v371 = vshrl.u32 %v370, 7
  %v372 = vsub.s32 %v369, %v371
  %v373 = vrot.slane %v350, %v372
  %v375 = vunpack.c.l.s4 1983009808
  %v376 = vunpack.c.0.s8 %v375
  %v377 = vlaneseq
  %v378 = vshrl.u32 %v377, 7
  %v379 = vsub.s32 %v376, %v378
  %v380 = vrot.slane %v366, %v379
  %v381 = vcombine.high %v373, %v373
  %v382 = vcombine.high %v380, %v380
  %v383 = vcombine.high %v351, %v351
  %v385 = vunpack.c.l.s4 1983009808
  %v386 = vunpack.c.0.s8 %v385
  %v387 = vlaneseq
  %v388 = vshrl.u32 %v387, 7
  %v389 = vsub.s32 %v386, %v388
  %v390 = vrot.slane %v351, %v389
  %v392 = vunpack.c.l.s4 1983009808
  %v393 = vunpack.c.0.s8 %v392
  %v394 = vlaneseq
  %v395 = vshrl.u32 %v394, 7
  %v396 = vsub.s32 %v393, %v395
  %v397 = vrot.slane %v383, %v396
  %v398 = vcombine.high %v390, %v390
  %v399 = vcombine.high %v397, %v397
  %v400 = vcombine.high %v352, %v352
  %v402 = vunpack.c.l.s4 1983009808
  %v403 = vunpack.c.0.s8 %v402
  %v404 = vlaneseq
  %v405 = vshrl.u32 %v404, 7
  %v406 = vsub.s32 %v403, %v405
  %v407 = vrot.slane %v352, %v406
  %v409 = vunpack.c.l.s4 1983009808
  %v410 = vunpack.c.0.s8 %v409
  %v411 = vlaneseq
  %v412 = vshrl.u32 %v411, 7
  %v413 = vsub.s32 %v410, %v412
  %v414 = vrot.slane %v400, %v413
  %v415 = vcombine.high %v407, %v407
  %v416 = vcombine.high %v414, %v414
  %v417 = vcombine.high %v353, %v353
  %v419 = vunpack.c.l.s4 1983009808
  %v420 = vunpack.c.0.s8 %v419
  %v421 = vlaneseq
  %v422 = vshrl.u32 %v421, 7
  %v423 = vsub.s32 %v420, %v422
  %v424 = vrot.slane %v353, %v423
  %v426 = vunpack.c.l.s4 1983009808
  %v427 = vunpack.c.0.s8 %v426
  %v428 = vlaneseq
  %v429 = vshrl.u32 %v428, 7
  %v430 = vsub.s32 %v427, %v429
  %v431 = vrot.slane %v417, %v430
  %v432 = vcombine.high %v424, %v424
  %v433 = vcombine.high %v431, %v431
  %v434 = vcombine.high %v354, %v354
  %v436 = vunpack.c.l.s4 1983009808
  %v437 = vunpack.c.0.s8 %v436
  %v438 = vlaneseq
  %v439 = vshrl.u32 %v438, 7
  %v440 = vsub.s32 %v437, %v439
  %v441 = vrot.slane %v354, %v440
  %v443 = vunpack.c.l.s4 1983009808
  %v444 = vunpack.c.0.s8 %v443
  %v445 = vlaneseq
  %v446 = vshrl.u32 %v445, 7
  %v447 = vsub.s32 %v444, %v446
  %v448 = vrot.slane %v434, %v447
  %v449 = vcombine.high %v441, %v441
  %v450 = vcombine.high %v448, %v448
  %v451 = vcombine.high %v355, %v355
  %v453 = vunpack.c.l.s4 1983009808
  %v454 = vunpack.c.0.s8 %v453
  %v455 = vlaneseq
  %v456 = vshrl.u32 %v455, 7
  %v457 = vsub.s32 %v454, %v456
  %v458 = vrot.slane %v355, %v457
  %v460 = vunpack.c.l.s4 1983009808
  %v461 = vunpack.c.0.s8 %v460
  %v462 = vlaneseq
  %v463 = vshrl.u32 %v462, 7
  %v464 = vsub.s32 %v461, %v463
  %v465 = vrot.slane %v451, %v464
  %v466 = vcombine.high %v458, %v458
  %v467 = vcombine.high %v465, %v465
  %v468 = vcombine.high %v356, %v356
  %v470 = vunpack.c.l.s4 1983009808
  %v471 = vunpack.c.0.s8 %v470
  %v472 = vlaneseq
  %v473 = vshrl.u32 %v472, 7
  %v474 = vsub.s32 %v471, %v473
  %v475 = vrot.slane %v356, %v474
  %v477 = vunpack.c.l.s4 1983009808
  %v478 = vunpack.c.0.s8 %v477
  %v479 = vlaneseq
  %v480 = vshrl.u32 %v479, 7
  %v481 = vsub.s32 %v478, %v480
  %v482 = vrot.slane %v468, %v481
  %v483 = vcombine.high %v475, %v475
  %v484 = vcombine.high %v482, %v482
  %v485 = vcombine.high %v357, %v357
  %v487 = vunpack.c.l.s4 1983009808
  %v488 = vunpack.c.0.s8 %v487
  %v489 = vlaneseq
  %v490 = vshrl.u32 %v489, 7
  %v491 = vsub.s32 %v488, %v490
  %v492 = vrot.slane %v357, %v491
  %v494 = vunpack.c.l.s4 1983009808
  %v495 = vunpack.c.0.s8 %v494
  %v496 = vlaneseq
  %v497 = vshrl.u32 %v496, 7
  %v498 = vsub.s32 %v495, %v497
  %v499 = vrot.slane %v485, %v498
  %v500 = vcombine.high %v492, %v492
  %v501 = vcombine.high %v499, %v499
  %vm534 = vcmask 1041408
  %v535 = vsel %vm534, %v373, -inf
  %v536 = vrot.slane %v535, 4
  %v537 = vmax.f32 %v535, %v536
  %v538 = vrot.slane %v537, 2
  %v539 = vmax.f32 %v537, %v538
  %v540 = vrot.slane %v539, 1
  %v541 = vmax.f32 %v539, %v540
  %v542 = vsel %vm534, %v381, -inf
  %v543 = vrot.slane %v542, 4
  %v544 = vmax.f32 %v542, %v543
  %v545 = vrot.slane %v544, 2
  %v546 = vmax.f32 %v544, %v545
  %v547 = vrot.slane %v546, 1
  %v548 = vmax.f32 %v546, %v547
  %v549 = vsel %vm534, %v380, -inf
  %v550 = vrot.slane %v549, 4
  %v551 = vmax.f32 %v549, %v550
  %v552 = vrot.slane %v551, 2
  %v553 = vmax.f32 %v551, %v552
  %v554 = vrot.slane %v553, 1
  %v555 = vmax.f32 %v553, %v554
  %v556 = vsel %vm534, %v382, -inf
  %v557 = vrot.slane %v556, 4
  %v558 = vmax.f32 %v556, %v557
  %v559 = vrot.slane %v558, 2
  %v560 = vmax.f32 %v558, %v559
  %v561 = vrot.slane %v560, 1
  %v562 = vmax.f32 %v560, %v561
  %v563 = vsel %vm534, %v390, -inf
  %v564 = vrot.slane %v563, 4
  %v565 = vmax.f32 %v563, %v564
  %v566 = vrot.slane %v565, 2
  %v567 = vmax.f32 %v565, %v566
  %v568 = vrot.slane %v567, 1
  %v569 = vmax.f32 %v567, %v568
  %v570 = vsel %vm534, %v398, -inf
  %v571 = vrot.slane %v570, 4
  %v572 = vmax.f32 %v570, %v571
  %v573 = vrot.slane %v572, 2
  %v574 = vmax.f32 %v572, %v573
  %v575 = vrot.slane %v574, 1
  %v576 = vmax.f32 %v574, %v575
  %v577 = vsel %vm534, %v397, -inf
  %v578 = vrot.slane %v577, 4
  %v579 = vmax.f32 %v577, %v578
  %v580 = vrot.slane %v579, 2
  %v581 = vmax.f32 %v579, %v580
  %v582 = vrot.slane %v581, 1
  %v583 = vmax.f32 %v581, %v582
  %v584 = vsel %vm534, %v399, -inf
  %v585 = vrot.slane %v584, 4
  %v586 = vmax.f32 %v584, %v585
  %v587 = vrot.slane %v586, 2
  %v588 = vmax.f32 %v586, %v587
  %v589 = vrot.slane %v588, 1
  %v590 = vmax.f32 %v588, %v589
  %v591 = vsel %vm534, %v407, -inf
  %v592 = vrot.slane %v591, 4
  %v593 = vmax.f32 %v591, %v592
  %v594 = vrot.slane %v593, 2
  %v595 = vmax.f32 %v593, %v594
  %v596 = vrot.slane %v595, 1
  %v597 = vmax.f32 %v595, %v596
  %v598 = vsel %vm534, %v415, -inf
  %v599 = vrot.slane %v598, 4
  %v600 = vmax.f32 %v598, %v599
  %v601 = vrot.slane %v600, 2
  %v602 = vmax.f32 %v600, %v601
  %v603 = vrot.slane %v602, 1
  %v604 = vmax.f32 %v602, %v603
  %v605 = vsel %vm534, %v414, -inf
  %v606 = vrot.slane %v605, 4
  %v607 = vmax.f32 %v605, %v606
  %v608 = vrot.slane %v607, 2
  %v609 = vmax.f32 %v607, %v608
  %v610 = vrot.slane %v609, 1
  %v611 = vmax.f32 %v609, %v610
  %v612 = vsel %vm534, %v416, -inf
  %v613 = vrot.slane %v612, 4
  %v614 = vmax.f32 %v612, %v613
  %v615 = vrot.slane %v614, 2
  %v616 = vmax.f32 %v614, %v615
  %v617 = vrot.slane %v616, 1
  %v618 = vmax.f32 %v616, %v617
  %v619 = vsel %vm534, %v424, -inf
  %v620 = vrot.slane %v619, 4
  %v621 = vmax.f32 %v619, %v620
  %v622 = vrot.slane %v621, 2
  %v623 = vmax.f32 %v621, %v622
  %v624 = vrot.slane %v623, 1
  %v625 = vmax.f32 %v623, %v624
  %v626 = vsel %vm534, %v432, -inf
  %v627 = vrot.slane %v626, 4
  %v628 = vmax.f32 %v626, %v627
  %v629 = vrot.slane %v628, 2
  %v630 = vmax.f32 %v628, %v629
  %v631 = vrot.slane %v630, 1
  %v632 = vmax.f32 %v630, %v631
  %v633 = vsel %vm534, %v431, -inf
  %v634 = vrot.slane %v633, 4
  %v635 = vmax.f32 %v633, %v634
  %v636 = vrot.slane %v635, 2
  %v637 = vmax.f32 %v635, %v636
  %v638 = vrot.slane %v637, 1
  %v639 = vmax.f32 %v637, %v638
  %v640 = vsel %vm534, %v433, -inf
  %v641 = vrot.slane %v640, 4
  %v642 = vmax.f32 %v640, %v641
  %v643 = vrot.slane %v642, 2
  %v644 = vmax.f32 %v642, %v643
  %v645 = vrot.slane %v644, 1
  %v646 = vmax.f32 %v644, %v645
  %v647 = vsel %vm534, %v441, -inf
  %v648 = vrot.slane %v647, 4
  %v649 = vmax.f32 %v647, %v648
  %v650 = vrot.slane %v649, 2
  %v651 = vmax.f32 %v649, %v650
  %v652 = vrot.slane %v651, 1
  %v653 = vmax.f32 %v651, %v652
  %v654 = vsel %vm534, %v449, -inf
  %v655 = vrot.slane %v654, 4
  %v656 = vmax.f32 %v654, %v655
  %v657 = vrot.slane %v656, 2
  %v658 = vmax.f32 %v656, %v657
  %v659 = vrot.slane %v658, 1
  %v660 = vmax.f32 %v658, %v659
  %v661 = vsel %vm534, %v448, -inf
  %v662 = vrot.slane %v661, 4
  %v663 = vmax.f32 %v661, %v662
  %v664 = vrot.slane %v663, 2
  %v665 = vmax.f32 %v663, %v664
  %v666 = vrot.slane %v665, 1
  %v667 = vmax.f32 %v665, %v666
  %v668 = vsel %vm534, %v450, -inf
  %v669 = vrot.slane %v668, 4
  %v670 = vmax.f32 %v668, %v669
  %v671 = vrot.slane %v670, 2
  %v672 = vmax.f32 %v670, %v671
  %v673 = vrot.slane %v672, 1
  %v674 = vmax.f32 %v672, %v673
  %v675 = vsel %vm534, %v458, -inf
  %v676 = vrot.slane %v675, 4
  %v677 = vmax.f32 %v675, %v676
  %v678 = vrot.slane %v677, 2
  %v679 = vmax.f32 %v677, %v678
  %v680 = vrot.slane %v679, 1
  %v681 = vmax.f32 %v679, %v680
  %v682 = vsel %vm534, %v466, -inf
  %v683 = vrot.slane %v682, 4
  %v684 = vmax.f32 %v682, %v683
  %v685 = vrot.slane %v684, 2
  %v686 = vmax.f32 %v684, %v685
  %v687 = vrot.slane %v686, 1
  %v688 = vmax.f32 %v686, %v687
  %v689 = vsel %vm534, %v465, -inf
  %v690 = vrot.slane %v689, 4
  %v691 = vmax.f32 %v689, %v690
  %v692 = vrot.slane %v691, 2
  %v693 = vmax.f32 %v691, %v692
  %v694 = vrot.slane %v693, 1
  %v695 = vmax.f32 %v693, %v694
  %v696 = vsel %vm534, %v467, -inf
  %v697 = vrot.slane %v696, 4
  %v698 = vmax.f32 %v696, %v697
  %v699 = vrot.slane %v698, 2
  %v700 = vmax.f32 %v698, %v699
  %v701 = vrot.slane %v700, 1
  %v702 = vmax.f32 %v700, %v701
  %v703 = vsel %vm534, %v475, -inf
  %v704 = vrot.slane %v703, 4
  %v705 = vmax.f32 %v703, %v704
  %v706 = vrot.slane %v705, 2
  %v707 = vmax.f32 %v705, %v706
  %v708 = vrot.slane %v707, 1
  %v709 = vmax.f32 %v707, %v708
  %v710 = vsel %vm534, %v483, -inf
  %v711 = vrot.slane %v710, 4
  %v712 = vmax.f32 %v710, %v711
  %v713 = vrot.slane %v712, 2
  %v714 = vmax.f32 %v712, %v713
  %v715 = vrot.slane %v714, 1
  %v716 = vmax.f32 %v714, %v715
  %v717 = vsel %vm534, %v482, -inf
  %v718 = vrot.slane %v717, 4
  %v719 = vmax.f32 %v717, %v718
  %v720 = vrot.slane %v719, 2
  %v721 = vmax.f32 %v719, %v720
  %v722 = vrot.slane %v721, 1
  %v723 = vmax.f32 %v721, %v722
  %v724 = vsel %vm534, %v484, -inf
  %v725 = vrot.slane %v724, 4
  %v726 = vmax.f32 %v724, %v725
  %v727 = vrot.slane %v726, 2
  %v728 = vmax.f32 %v726, %v727
  %v729 = vrot.slane %v728, 1
  %v730 = vmax.f32 %v728, %v729
  %v731 = vsel %vm534, %v492, -inf
  %v732 = vrot.slane %v731, 4
  %v733 = vmax.f32 %v731, %v732
  %v734 = vrot.slane %v733, 2
  %v735 = vmax.f32 %v733, %v734
  %v736 = vrot.slane %v735, 1
  %v737 = vmax.f32 %v735, %v736
  %v738 = vsel %vm534, %v500, -inf
  %v739 = vrot.slane %v738, 4
  %v740 = vmax.f32 %v738, %v739
  %v741 = vrot.slane %v740, 2
  %v742 = vmax.f32 %v740, %v741
  %v743 = vrot.slane %v742, 1
  %v744 = vmax.f32 %v742, %v743
  %v745 = vsel %vm534, %v499, -inf
  %v746 = vrot.slane %v745, 4
  %v747 = vmax.f32 %v745, %v746
  %v748 = vrot.slane %v747, 2
  %v749 = vmax.f32 %v747, %v748
  %v750 = vrot.slane %v749, 1
  %v751 = vmax.f32 %v749, %v750
  %v752 = vsel %vm534, %v501, -inf
  %v753 = vrot.slane %v752, 4
  %v754 = vmax.f32 %v752, %v753
  %v755 = vrot.slane %v754, 2
  %v756 = vmax.f32 %v754, %v755
  %v757 = vrot.slane %v756, 1
  %v758 = vmax.f32 %v756, %v757
  %v759 = vsub.f32 %v541, %v246
  %v760 = vsub.f32 %v548, %v246
  %v761 = vsub.f32 %v555, %v246
  %v762 = vsub.f32 %v562, %v246
  %v763 = vsub.f32 %v569, %v246
  %v764 = vsub.f32 %v576, %v246
  %v765 = vsub.f32 %v583, %v246
  %v766 = vsub.f32 %v590, %v246
  %v767 = vsub.f32 %v597, %v246
  %v768 = vsub.f32 %v604, %v246
  %v769 = vsub.f32 %v611, %v246
  %v770 = vsub.f32 %v618, %v246
  %v771 = vsub.f32 %v625, %v246
  %v772 = vsub.f32 %v632, %v246
  %v773 = vsub.f32 %v639, %v246
  %v774 = vsub.f32 %v646, %v246
  %v775 = vsub.f32 %v653, %v246
  %v776 = vsub.f32 %v660, %v246
  %v777 = vsub.f32 %v667, %v246
  %v778 = vsub.f32 %v674, %v246
  %v779 = vsub.f32 %v681, %v246
  %v780 = vsub.f32 %v688, %v246
  %v781 = vsub.f32 %v695, %v246
  %v782 = vsub.f32 %v702, %v246
  %v783 = vsub.f32 %v709, %v246
  %v784 = vsub.f32 %v716, %v246
  %v785 = vsub.f32 %v723, %v246
  %v786 = vsub.f32 %v730, %v246
  %v787 = vsub.f32 %v737, %v246
  %v788 = vsub.f32 %v744, %v246
  %v789 = vsub.f32 %v751, %v246
  %v790 = vsub.f32 %v758, %v246
  %v791 = vmul.f32 %v759, %v251
  %v792 = vmul.f32 %v760, %v251
  %v793 = vmul.f32 %v761, %v251
  %v794 = vmul.f32 %v762, %v251
  %v795 = vmul.f32 %v763, %v251
  %v796 = vmul.f32 %v764, %v251
  %v797 = vmul.f32 %v765, %v251
  %v798 = vmul.f32 %v766, %v251
  %v799 = vmul.f32 %v767, %v251
  %v800 = vmul.f32 %v768, %v251
  %v801 = vmul.f32 %v769, %v251
  %v802 = vmul.f32 %v770, %v251
  %v803 = vmul.f32 %v771, %v251
  %v804 = vmul.f32 %v772, %v251
  %v805 = vmul.f32 %v773, %v251
  %v806 = vmul.f32 %v774, %v251
  %v807 = vmul.f32 %v775, %v251
  %v808 = vmul.f32 %v776, %v251
  %v809 = vmul.f32 %v777, %v251
  %v810 = vmul.f32 %v778, %v251
  %v811 = vmul.f32 %v779, %v251
  %v812 = vmul.f32 %v780, %v251
  %v813 = vmul.f32 %v781, %v251
  %v814 = vmul.f32 %v782, %v251
  %v815 = vmul.f32 %v783, %v251
  %v816 = vmul.f32 %v784, %v251
  %v817 = vmul.f32 %v785, %v251
  %v818 = vmul.f32 %v786, %v251
  %v819 = vmul.f32 %v787, %v251
  %v820 = vmul.f32 %v788, %v251
  %v821 = vmul.f32 %v789, %v251
  %v822 = vmul.f32 %v790, %v251
  %v823 = vmax.f32 %v791, 0.0
  %v824 = vmax.f32 %v792, 0.0
  %v825 = vmax.f32 %v793, 0.0
  %v826 = vmax.f32 %v794, 0.0
  %v827 = vmax.f32 %v795, 0.0
  %v828 = vmax.f32 %v796, 0.0
  %v829 = vmax.f32 %v797, 0.0
  %v830 = vmax.f32 %v798, 0.0
  %v831 = vmax.f32 %v799, 0.0
  %v832 = vmax.f32 %v800, 0.0
  %v833 = vmax.f32 %v801, 0.0
  %v834 = vmax.f32 %v802, 0.0
  %v835 = vmax.f32 %v803, 0.0
  %v836 = vmax.f32 %v804, 0.0
  %v837 = vmax.f32 %v805, 0.0
  %v838 = vmax.f32 %v806, 0.0
  %v839 = vmax.f32 %v807, 0.0
  %v840 = vmax.f32 %v808, 0.0
  %v841 = vmax.f32 %v809, 0.0
  %v842 = vmax.f32 %v810, 0.0
  %v843 = vmax.f32 %v811, 0.0
  %v844 = vmax.f32 %v812, 0.0
  %v845 = vmax.f32 %v813, 0.0
  %v846 = vmax.f32 %v814, 0.0
  %v847 = vmax.f32 %v815, 0.0
  %v848 = vmax.f32 %v816, 0.0
  %v849 = vmax.f32 %v817, 0.0
  %v850 = vmax.f32 %v818, 0.0
  %v851 = vmax.f32 %v819, 0.0
  %v852 = vmax.f32 %v820, 0.0
  %v853 = vmax.f32 %v821, 0.0
  %v854 = vmax.f32 %v822, 0.0
  %v887 = vrot.slane %v824, 7
  %vm888 = vcmask 1041409
  %v889 = vsel %vm888, %v887, %v823
  %v890 = vrot.slane %v825, 6
  %vm891 = vcmask 1042434
  %v892 = vsel %vm891, %v890, %v889
  %v893 = vrot.slane %v826, 5
  %vm894 = vcmask 1043459
  %v895 = vsel %vm894, %v893, %v892
  %v896 = vrot.slane %v828, 7
  %v897 = vsel %vm888, %v896, %v827
  %v898 = vrot.slane %v829, 6
  %v899 = vsel %vm891, %v898, %v897
  %v900 = vrot.slane %v830, 5
  %v901 = vsel %vm894, %v900, %v899
  %v902 = vrot.slane %v832, 7
  %v903 = vsel %vm888, %v902, %v831
  %v904 = vrot.slane %v833, 6
  %v905 = vsel %vm891, %v904, %v903
  %v906 = vrot.slane %v834, 5
  %v907 = vsel %vm894, %v906, %v905
  %v908 = vrot.slane %v836, 7
  %v909 = vsel %vm888, %v908, %v835
  %v910 = vrot.slane %v837, 6
  %v911 = vsel %vm891, %v910, %v909
  %v912 = vrot.slane %v838, 5
  %v913 = vsel %vm894, %v912, %v911
  %v914 = vrot.slane %v840, 7
  %v915 = vsel %vm888, %v914, %v839
  %v916 = vrot.slane %v841, 6
  %v917 = vsel %vm891, %v916, %v915
  %v918 = vrot.slane %v842, 5
  %v919 = vsel %vm894, %v918, %v917
  %v920 = vrot.slane %v844, 7
  %v921 = vsel %vm888, %v920, %v843
  %v922 = vrot.slane %v845, 6
  %v923 = vsel %vm891, %v922, %v921
  %v924 = vrot.slane %v846, 5
  %v925 = vsel %vm894, %v924, %v923
  %v926 = vrot.slane %v848, 7
  %v927 = vsel %vm888, %v926, %v847
  %v928 = vrot.slane %v849, 6
  %v929 = vsel %vm891, %v928, %v927
  %v930 = vrot.slane %v850, 5
  %v931 = vsel %vm894, %v930, %v929
  %v932 = vrot.slane %v852, 7
  %v933 = vsel %vm888, %v932, %v851
  %v934 = vrot.slane %v853, 6
  %v935 = vsel %vm891, %v934, %v933
  %v936 = vrot.slane %v854, 5
  %v937 = vsel %vm894, %v936, %v935
  %946 = vst [vmem:[%s2] sm:$0xf] %v895
  %947 = vst [vmem:[%s2 + $0x4] sm:$0xf] %v901
  %948 = vst [vmem:[%s2 + $0x8] sm:$0xf] %v907
  %949 = vst [vmem:[%s2 + $0xc] sm:$0xf] %v913
  %950 = vst [vmem:[%s2 + $0x10] sm:$0xf] %v919
  %951 = vst [vmem:[%s2 + $0x14] sm:$0xf] %v925
  %952 = vst [vmem:[%s2 + $0x18] sm:$0xf] %v931
  %953 = vst [vmem:[%s2 + $0x1c] sm:$0xf] %v937
  // Predicated region
  $region10: #{module1_forward.1} parent=0 // pred_check
    _
  $region11: #{module1_forward.1} parent=0 // pred_check_branch
    %955 = sbr.rel (0) target = $region13
  $region12: #{module1_forward.1} parent=0 // pred_region
    _
  $region13: #{module1_forward.1} parent=0 // pred_fallthru
    _
  // Predicated region
  $region14: #{module1_forward.1} parent=0 // pred_check
    _
  $region15: #{module1_forward.1} parent=0 // pred_check_branch
    %957 = sbr.rel (0) target = $region17
  $region16: #{module1_forward.1} parent=0 // pred_region
    _
  $region17: #{module1_forward.1} parent=0 // pred_fallthru
    _

</llo_original>
